<compile_context>
chip_gen: v7x
topology: tpu7x:2x2x1
jax: 0.10.0
libtpu: 0.0.40
codegen_flags: <defaults>
</compile_context>

<pallas_src>
import jax
import jax.numpy as jnp
from jax.experimental import pallas as pl
from jax.experimental.pallas import tpu as pltpu


def _identity_kernel(in_ref, out_ref):
    # Pure pass-through: copy the current VMEM tile to the (aliased) output tile.
    out_ref[...] = in_ref[...]


def clear_outs_layer_forward(data, inp, outs):
    """Exact equivalent of ClearOutsLayer.forward: zero-cost pass-through."""
    del data, outs  # unused, exactly as in the reference module
    return inp


def _lane_dense_2d(shape):
    """Pick a lane-dense 2-D (rows, cols) factorization of `shape`.

    Prefers a large lane extent that is a multiple of 128 (unmasked vst, fewer
    DMA descriptors).  Falls back to using the original trailing dim as the
    full lane extent, which is always a legal BlockSpec last dim.
    """
    total = 1
    for d in shape:
        total *= int(d)
    for cols in (8192, 4096, 2048, 1024, 512, 384, 256, 128):
        if total % cols == 0:
            return total // cols, cols
    cols = int(shape[-1])
    return total // cols, cols


def clear_outs_layer_forward_pallas(data, inp, outs, *,
                                    target_tile_bytes=2 * 1024 * 1024):
    """Pass-through routed through a Pallas identity kernel (plumbing path)."""
    del data, outs  # unused, as in the reference module

    orig_shape = inp.shape
    orig_dtype = inp.dtype

    rows, cols = _lane_dense_2d(orig_shape)
    x2d = inp.reshape(rows, cols)

    itemsize = jnp.dtype(orig_dtype).itemsize
    row_bytes = cols * itemsize

    # Tile over rows only. Lane dim is always the full array extent, so the
    # (8,128)-or-full-dim rule is satisfied for any shape. Target ~2 MiB tiles:
    # 2 double-buffers x (in + out) ~ 8 MiB, safe under v7x's 32 MiB scoped /
    # 64 MiB physical VMEM and v5e/v6e's larger budgets.
    tile_rows = max(1, target_tile_bytes // max(1, row_bytes))
    tile_rows = max(8, (tile_rows // 8) * 8)
    if tile_rows >= rows:
        tile_rows = rows  # full second-to-last dim: always a legal block dim
    grid_rows = pl.cdiv(rows, tile_rows)

    out2d = pl.pallas_call(
        _identity_kernel,
        out_shape=jax.ShapeDtypeStruct((rows, cols), orig_dtype),
        grid=(grid_rows,),
        in_specs=[pl.BlockSpec((tile_rows, cols), lambda i: (i, 0))],
        out_specs=pl.BlockSpec((tile_rows, cols), lambda i: (i, 0)),
        # Identity: let XLA alias the input buffer to the output (no second
        # HBM allocation; the copy can be elided entirely when legal).
        input_output_aliases={0: 0},
        cost_estimate=pl.CostEstimate(
            flops=0,
            transcendentals=0,
            bytes_accessed=2 * rows * cols * itemsize,
        ),
        compiler_params=pltpu.CompilerParams(
            # Row axis is fully parallel; on v7x this lets the two TensorCores
            # split the (DMA-bound) work; measured no-op on v5e/v6e.
            dimension_semantics=("parallel",),
        ),
    )(x2d)

    return out2d.reshape(orig_shape)


if __name__ == "__main__":
    key = jax.random.PRNGKey(0)
    k_data, k_inp, k_outs = jax.random.split(key, 3)

    # Small NCHW activation shapes consistent with the module's usage.
    B, C, H, W = 2, 4, 16, 16
    data = jax.random.normal(k_data, (B, C, H, W), dtype=jnp.float32)  # ignored
    inp = jax.random.normal(k_inp, (B, C, H, W), dtype=jnp.float32)
    outs = jax.random.normal(k_outs, (B, C, H, W), dtype=jnp.float32)  # ignored

    # Production path: true zero-cost pass-through (no kernel launch).
    out_fast = clear_outs_layer_forward(data, inp, outs)
    assert out_fast.shape == inp.shape and out_fast.dtype == inp.dtype

    # Pallas plumbing path: identity kernel with aliasing + lane-dense tiling.
    out = clear_outs_layer_forward_pallas(data, inp, outs)
    out = jax.block_until_ready(out)
    assert out.shape == inp.shape and out.dtype == inp.dtype
    assert bool(jnp.array_equal(out, inp))

    # Odd, non-128-divisible shape exercises the row-tiled fallback
    # (no full-array VMEM-bomb block).
    inp_odd = jax.random.normal(key, (2, 3, 5, 7), dtype=jnp.float32)
    out_odd = jax.block_until_ready(
        clear_outs_layer_forward_pallas(inp_odd, inp_odd, inp_odd))
    assert bool(jnp.array_equal(out_odd, inp_odd))

    print("KERNEL_OK")
</pallas_src>

<mosaic_0001>
module attributes {stable_mosaic.version = 11 : i64} {
  func.func @_identity_kernel(%arg0: i32, %arg1: memref<1x2048xf32, #tpu.memory_space<vmem>>, %arg2: memref<1x2048xf32, #tpu.memory_space<vmem>>) attributes {dimension_semantics = [#tpu.dimension_semantics<parallel>], iteration_bounds = array<i64: 1>, scalar_prefetch = 0 : i64, scratch_operands = 0 : i64, tpu.core_type = #tpu.core_type<tc>, window_params = [{transform_indices = @transform_0, window_bounds = array<i64: 1, 2048>}, {transform_indices = @transform_1, window_bounds = array<i64: 1, 2048>}]} {
    %c0 = arith.constant 0 : index
    %c0_0 = arith.constant 0 : index
    %0 = vector.load %arg1[%c0, %c0_0] : memref<1x2048xf32, #tpu.memory_space<vmem>>, vector<1x2048xf32>
    %c0_1 = arith.constant 0 : index
    %c0_2 = arith.constant 0 : index
    %1 = vector.load %arg2[%c0_1, %c0_2] : memref<1x2048xf32, #tpu.memory_space<vmem>>, vector<1x2048xf32>
    tpu.vector_store %arg2[%c0_1, %c0_2], %0 {strides = array<i32>} : memref<1x2048xf32, #tpu.memory_space<vmem>>, vector<1x2048xf32>,
    return
  }
  func.func @transform_0(%arg0: i32) -> (i32, i32) {
    %c0_i32 = arith.constant 0 : i32
    %c0_i32_0 = arith.constant 0 : i32
    return %arg0, %c0_i32 : i32, i32
  }
  func.func @transform_1(%arg0: i32) -> (i32, i32) {
    %c0_i32 = arith.constant 0 : i32
    %c0_i32_0 = arith.constant 0 : i32
    return %arg0, %c0_i32 : i32, i32
  }
}

</mosaic_0001>

<llo_original>
// kernel: tpu_custom_call.1
$region0: #{tpu_custom_call.1}
  #allocation0 [shape = 'u32[]', space=smem, size = 0x4, offset = 0x4, fixed_abs, tag = 'smem constant byte address 0x4 - core index']
  #allocation1 [shape = 'u32[144,128]{1,0:T(1,128)}', space=vmem, size = 0x12000, scoped, tag = 'internal scratch']
  %s0 = inlined_call_operand.hbm [shape: f32[1,2048], index: 0, kind: input, shape index: {}, may-alias: {0,1}]
  %s1 = inlined_call_operand.hbm [shape: f32[1,2048], index: 1, kind: output, shape index: {}, may-alias: {0,1}]
  %s2 = sld [smem:[#allocation0]]
  $region18: #{tpu_custom_call.1} parent=0
    _
  %s4 = ssub.s32 1, %s2
  %s5 = scalar_select 0, %s4, %s2
  $region1: #{tpu_custom_call.1} parent=0
    #allocation2 [shape = 'u8[8192]{0}', space=vmem, size = 0x2000, scoped, tag = 'input window, operand 0, single buffered']
    #allocation3 [shape = 's32[1]{0}', space=sflag, size = 0x4, scoped, tag = 'scoped memory for tpu_custom_call.1']
    #allocation4 [shape = 's32[1]{0}', space=sflag, size = 0x4, scoped, tag = 'scoped memory for tpu_custom_call.1']
    #allocation5 [shape = 'u8[8192]{0}', space=vmem, size = 0x2000, scoped, tag = 'output window, operand 0, single buffered']
    %6 = vsyncpa [#allocation3], 0
    %7 = vsyncpa [#allocation4], 0
    // Predicated region
    $region2: #{tpu_custom_call.1} parent=1 // pred_check
      _
    $region3: #{tpu_custom_call.1} parent=1 // pred_check_branch
      %9 = sbr.rel (0) target = $region5
    $region4: #{tpu_custom_call.1} parent=1 // pred_region
      %s11 = ssub.s32 256, 256
      %12 = vsyncadd [#allocation3], %s11
      %s14 = sshll.u32 [#allocation2], 4
      %s15 = int_to_ptr.vmem [resolvable:$true] %s14
      %17 = dma.hbm_to_vmem [thread:$0]  %s0, 256, %s15, [#allocation3]
    $region5: #{tpu_custom_call.1} parent=1 // pred_fallthru
      _
    // Predicated region
    $region6: #{tpu_custom_call.1} parent=1 // pred_check
      _
    $region7: #{tpu_custom_call.1} parent=1 // pred_check_branch
      %19 = sbr.rel (0) target = $region9
    $region8: #{tpu_custom_call.1} parent=1 // pred_region
      %20 = dma.done [#allocation3], 256
    $region9: #{tpu_custom_call.1} parent=1 // pred_fallthru
      _
    %v21 = vld [vmem:[#allocation2] sm:$0xff]
    %v22 = vld [vmem:[#allocation2 + $0x8] sm:$0xff]
    %23 = vst [vmem:[#allocation5] sm:$0xff] %v21
    %24 = vst [vmem:[#allocation5 + $0x8] sm:$0xff] %v22
    // Predicated region
    $region10: #{tpu_custom_call.1} parent=1 // pred_check
      _
    $region11: #{tpu_custom_call.1} parent=1 // pred_check_branch
      %26 = sbr.rel (0) target = $region13
    $region12: #{tpu_custom_call.1} parent=1 // pred_region
      %s28 = ssub.s32 256, 256
      %29 = vsyncadd [#allocation4], %s28
      %s31 = sshll.u32 [#allocation5], 4
      %s32 = int_to_ptr.vmem [resolvable:$true] %s31
      %34 = dma.vmem_to_hbm [thread:$0]  %s32, 256, %s1, [#allocation4]
    $region13: #{tpu_custom_call.1} parent=1 // pred_fallthru
      _
    // Predicated region
    $region14: #{tpu_custom_call.1} parent=1 // pred_check
      _
    $region15: #{tpu_custom_call.1} parent=1 // pred_check_branch
      %36 = sbr.rel (0) target = $region17
    $region16: #{tpu_custom_call.1} parent=1 // pred_region
      %37 = dma.done [#allocation4], 256
    $region17: #{tpu_custom_call.1} parent=1 // pred_fallthru
      _
    %38 = vsyncpa [#allocation3], 1
    %39 = vsyncpa [#allocation4], 1

</llo_original>
